<compile_context>
chip_gen: v5e
topology: v5e:2x2
jax: 0.10.0
libtpu: 0.0.40
codegen_flags: <defaults>
</compile_context>

<pallas_src>
import math

import jax
import jax.numpy as jnp
from jax.experimental import pallas as pl
from jax.experimental.pallas import tpu as pltpu


def _round_up(n, m):
    return ((n + m - 1) // m) * m


# ----------------------------- Pallas kernel ------------------------------ #

def _make_mlp_kernel(num_blocks, negative_slope=0.01):
    """Fused-MLP kernel for `num_blocks` Linear+LeakyReLU blocks + Linear(., 1).

    Ref layout (per grid step):
      x_ref : (TB, F)          natural row-major input tile
      w_k   : (out_k, in_k)    PyTorch order, hidden blocks (compute dtype)
      b_k   : (out_k, 1)       f32, broadcasts over the lane (batch) axis
      w_out : (last_hidden, 1) f32
      b_out : (1, 1)           f32
      o_ref : (1, TB)          batch on lanes -> unmasked, lane-dense store
    """

    def kernel(*refs):
        x_ref, o_ref = refs[0], refs[-1]
        prefs = refs[1:-1]
        ws = prefs[0::2]
        bs = prefs[1::2]

        def leaky(y):
            return jnp.where(y > 0, y, negative_slope * y)

        # Block 0: contract over the feature axis of the (TB, F) tile without
        # materializing a transpose: (out0, F) x (TB, F) -> (out0, TB).
        h = jax.lax.dot_general(
            ws[0][...], x_ref[...],
            dimension_numbers=(((1,), (1,)), ((), ())),
            preferred_element_type=jnp.float32)
        h = leaky(h + bs[0][...])

        # Remaining hidden blocks: W @ H -> (out_k, TB).  MXU operands in the
        # compute dtype, f32 accumulation, activation on the f32 accumulator.
        for k in range(1, num_blocks):
            w = ws[k][...]
            h = jnp.dot(w, h.astype(w.dtype),
                        preferred_element_type=jnp.float32)
            h = leaky(h + bs[k][...])

        # Output Linear(last_hidden, 1): a 1-wide matmul would use ~1/256 of
        # the MXU lanes, so do it on the VPU + a sublane reduce (XLU) instead.
        wo = ws[num_blocks][...].astype(jnp.float32)       # (last_hidden, 1)
        out = jnp.sum(h * wo, axis=0, keepdims=True) + bs[num_blocks][...]
        o_ref[...] = out.astype(o_ref.dtype)

    return kernel


# ------------------------------- wrapper ----------------------------------- #

def mlp_forward(x, params, *, batch_tile=512, compute_dtype=jnp.float32):
    """Run the fused MLP Pallas kernel.

    x      : (B, num_features)
    params : list of (W, b); hidden blocks W: (out, in), b: (out, 1);
             output layer W: (last_hidden, 1), b: (1, 1)
    returns: (B,) float32  (matches torch's x.squeeze() for out_dim == 1;
             for B == 1 torch returns a 0-d tensor, we return shape (1,))
    """
    B, F = x.shape
    num_blocks = len(params) - 1

    # Lane-dense batch tile (multiple of 128), many grid steps for pipelining
    # and for sharding the batch axis across TensorCores on v7x.
    tb = min(int(batch_tile), _round_up(B, 128))
    tb = max(128, _round_up(tb, 128))
    Bp = _round_up(B, tb)
    if Bp != B:
        x = jnp.pad(x, ((0, Bp - B), (0, 0)))

    x = x.astype(compute_dtype)   # bf16 here halves the dominant HBM traffic

    flat_params = []
    in_specs = [pl.BlockSpec((tb, F), lambda i: (i, 0))]
    for w, b in params[:num_blocks]:
        w = w.astype(compute_dtype)            # MXU operand
        b = b.astype(jnp.float32)              # bias add / activation in f32
        flat_params += [w, b]
        in_specs += [pl.BlockSpec(w.shape, lambda i: (0, 0)),
                     pl.BlockSpec(b.shape, lambda i: (0, 0))]
    wo, bo = params[-1]
    wo = wo.astype(jnp.float32)
    bo = bo.astype(jnp.float32)
    flat_params += [wo, bo]
    in_specs += [pl.BlockSpec(wo.shape, lambda i: (0, 0)),
                 pl.BlockSpec(bo.shape, lambda i: (0, 0))]

    grid = (Bp // tb,)

    out = pl.pallas_call(
        _make_mlp_kernel(num_blocks),
        out_shape=jax.ShapeDtypeStruct((1, Bp), jnp.float32),
        grid_spec=pltpu.PrefetchScalarGridSpec(
            num_scalar_prefetch=0,
            grid=grid,
            in_specs=in_specs,
            out_specs=pl.BlockSpec((1, tb), lambda i: (0, i)),
        ),
        compiler_params=pltpu.CompilerParams(
            dimension_semantics=("parallel",)),
        # NOTE: if the x DMA is still exposed for very skinny tiles, switch the
        # x BlockSpec to pipeline_mode=pl.Buffered(3).
    )(x, *flat_params)

    # torch: x.squeeze() on (B, 1) -> (B,)
    return out[0, :B]


# --------------------------- parameter creation ---------------------------- #

def he_linear_params(key, in_dim, out_dim):
    """Mirrors he_linear(): kaiming_normal_ (fan_in, leaky_relu -> gain sqrt(2))
    weights, zero bias. Weight stored in PyTorch (out_dim, in_dim) order, bias
    as an (out_dim, 1) column so it broadcasts over the lane (batch) axis."""
    std = math.sqrt(2.0) / math.sqrt(in_dim)
    w = std * jax.random.normal(key, (out_dim, in_dim), dtype=jnp.float32)
    b = jnp.zeros((out_dim, 1), dtype=jnp.float32)
    return w, b


def output_linear_params(key, in_dim):
    """PyTorch default nn.Linear(in_dim, 1) init: U(-1/sqrt(fan_in), +).
    Weight stored as an (in_dim, 1) column for the in-kernel VPU reduce."""
    bound = 1.0 / math.sqrt(in_dim)
    kw, kb = jax.random.split(key)
    w = jax.random.uniform(kw, (in_dim, 1), jnp.float32, -bound, bound)
    b = jax.random.uniform(kb, (1, 1), jnp.float32, -bound, bound)
    return w, b


def build_params(key, num_features, in_channels, hidden_layer_dims):
    dims = [num_features, in_channels] + list(hidden_layer_dims)
    keys = jax.random.split(key, len(dims))
    params = [he_linear_params(keys[i], dims[i], dims[i + 1])
              for i in range(len(dims) - 1)]
    params.append(output_linear_params(keys[-1], dims[-1]))
    return params


# ------------------------------ reference ---------------------------------- #

def mlp_reference(x, params, compute_dtype=jnp.float32):
    """Pure-JAX reference that mirrors the kernel's cast points exactly."""
    def cast(a):
        return a.astype(compute_dtype).astype(jnp.float32)

    h = x
    for w, b in params[:-1]:
        h = cast(h) @ cast(w).T + b[:, 0]
        h = jnp.where(h > 0, h, 0.01 * h)
    wo, bo = params[-1]
    return jnp.sum(h * wo[:, 0], axis=-1) + bo[0, 0]


# --------------------------------- main ------------------------------------ #

if __name__ == "__main__":
    # linear_model(num_features=32, in_channels=64, activation='leaky_relu',
    #              dropout_perc=0 (=> Identity), hidden_layer_dims=[64, 32])
    num_features = 32
    in_channels = 64
    hidden_layer_dims = [64, 32]

    key = jax.random.PRNGKey(0)
    kx, kx2, kp = jax.random.split(key, 3)
    params = build_params(kp, num_features, in_channels, hidden_layer_dims)

    # Small-batch check (batch=8, padded to a single lane-dense 128-row tile).
    x_small = jax.random.normal(kx, (8, num_features), dtype=jnp.float32)
    y = jax.block_until_ready(mlp_forward(x_small, params))
    y_ref = mlp_reference(x_small, params)
    assert y.shape == (8,), y.shape
    assert jnp.allclose(y, y_ref, atol=1e-4, rtol=1e-4)

    # Multi-tile check: grid > 1, batch padding (1000 -> 1024), tile = 256.
    x_big = jax.random.normal(kx2, (1000, num_features), dtype=jnp.float32)
    y_big = jax.block_until_ready(mlp_forward(x_big, params, batch_tile=256))
    y_big_ref = mlp_reference(x_big, params)
    assert y_big.shape == (1000,), y_big.shape
    assert jnp.allclose(y_big, y_big_ref, atol=1e-4, rtol=1e-4)

    # bf16-input path (halves HBM traffic of the memory-dominant x read).
    y_bf16 = jax.block_until_ready(
        mlp_forward(x_big, params, batch_tile=256, compute_dtype=jnp.bfloat16))
    y_bf16_ref = mlp_reference(x_big, params, compute_dtype=jnp.bfloat16)
    assert jnp.allclose(y_bf16, y_bf16_ref, atol=1e-2, rtol=1e-2)

    print("KERNEL_OK")
</pallas_src>

<mosaic_0001>
module attributes {stable_mosaic.version = 11 : i64} {
  func.func @kernel(%arg0: i32, %arg1: memref<128x32xf32, #tpu.memory_space<vmem>>, %arg2: memref<64x32xf32, #tpu.memory_space<vmem>>, %arg3: memref<64x1xf32, #tpu.memory_space<vmem>>, %arg4: memref<64x64xf32, #tpu.memory_space<vmem>>, %arg5: memref<64x1xf32, #tpu.memory_space<vmem>>, %arg6: memref<32x64xf32, #tpu.memory_space<vmem>>, %arg7: memref<32x1xf32, #tpu.memory_space<vmem>>, %arg8: memref<32x1xf32, #tpu.memory_space<vmem>>, %arg9: memref<1x1xf32, #tpu.memory_space<vmem>>, %arg10: memref<1x128xf32, #tpu.memory_space<vmem>>) attributes {dimension_semantics = [#tpu.dimension_semantics<parallel>], iteration_bounds = array<i64: 1>, scalar_prefetch = 0 : i64, scratch_operands = 0 : i64, tpu.core_type = #tpu.core_type<tc>, window_params = [{transform_indices = @transform_0, window_bounds = array<i64: 128, 32>}, {pipeline_mode = #tpu.pipeline_mode<synchronous>, transform_indices = @transform_1, window_bounds = array<i64: 64, 32>}, {pipeline_mode = #tpu.pipeline_mode<synchronous>, transform_indices = @transform_2, window_bounds = array<i64: 64, 1>}, {pipeline_mode = #tpu.pipeline_mode<synchronous>, transform_indices = @transform_3, window_bounds = array<i64: 64, 64>}, {pipeline_mode = #tpu.pipeline_mode<synchronous>, transform_indices = @transform_4, window_bounds = array<i64: 64, 1>}, {pipeline_mode = #tpu.pipeline_mode<synchronous>, transform_indices = @transform_5, window_bounds = array<i64: 32, 64>}, {pipeline_mode = #tpu.pipeline_mode<synchronous>, transform_indices = @transform_6, window_bounds = array<i64: 32, 1>}, {pipeline_mode = #tpu.pipeline_mode<synchronous>, transform_indices = @transform_7, window_bounds = array<i64: 32, 1>}, {pipeline_mode = #tpu.pipeline_mode<synchronous>, transform_indices = @transform_8, window_bounds = array<i64: 1, 1>}, {transform_indices = @transform_9, window_bounds = array<i64: 1, 128>}]} {
    %c0 = arith.constant 0 : index
    %c0_0 = arith.constant 0 : index
    %0 = vector.load %arg2[%c0, %c0_0] : memref<64x32xf32, #tpu.memory_space<vmem>>, vector<64x32xf32>
    %c0_1 = arith.constant 0 : index
    %c0_2 = arith.constant 0 : index
    %1 = vector.load %arg1[%c0_1, %c0_2] : memref<128x32xf32, #tpu.memory_space<vmem>>, vector<128x32xf32>
    %cst = arith.constant dense<0.000000e+00> : vector<64x128xf32>
    %2 = tpu.matmul %0, %1, %cst {dimension_numbers = #tpu.dot_dimension_numbers<[1], [1], [0], [0], [0, 0, 1, 0], [], []>} : vector<64x32xf32>, vector<128x32xf32>, vector<64x128xf32> -> vector<64x128xf32>
    %c0_3 = arith.constant 0 : index
    %c0_4 = arith.constant 0 : index
    %3 = vector.load %arg3[%c0_3, %c0_4] : memref<64x1xf32, #tpu.memory_space<vmem>>, vector<64x1xf32>
    %4 = vector.broadcast %3 : vector<64x1xf32> to vector<64x128xf32>
    %5 = arith.addf %2, %4 : vector<64x128xf32>
    %cst_5 = arith.constant 0.000000e+00 : f32
    %6 = vector.broadcast %cst_5 : f32 to vector<64x128xf32>
    %7 = arith.cmpf ogt, %5, %6 : vector<64x128xf32>
    %cst_6 = arith.constant 0.00999999977 : f32
    %8 = vector.broadcast %cst_6 : f32 to vector<64x128xf32>
    %9 = arith.mulf %8, %5 : vector<64x128xf32>
    %10 = arith.select %7, %5, %9 : vector<64x128xi1>, vector<64x128xf32>
    %c0_7 = arith.constant 0 : index
    %c0_8 = arith.constant 0 : index
    %11 = vector.load %arg4[%c0_7, %c0_8] : memref<64x64xf32, #tpu.memory_space<vmem>>, vector<64x64xf32>
    %cst_9 = arith.constant dense<0.000000e+00> : vector<64x128xf32>
    %12 = tpu.matmul %11, %10, %cst_9 {dimension_numbers = #tpu.dot_dimension_numbers<[1], [0], [0], [1], [0, 0, 1, 1], [], []>} : vector<64x64xf32>, vector<64x128xf32>, vector<64x128xf32> -> vector<64x128xf32>
    %c0_10 = arith.constant 0 : index
    %c0_11 = arith.constant 0 : index
    %13 = vector.load %arg5[%c0_10, %c0_11] : memref<64x1xf32, #tpu.memory_space<vmem>>, vector<64x1xf32>
    %14 = vector.broadcast %13 : vector<64x1xf32> to vector<64x128xf32>
    %15 = arith.addf %12, %14 : vector<64x128xf32>
    %cst_12 = arith.constant 0.000000e+00 : f32
    %16 = vector.broadcast %cst_12 : f32 to vector<64x128xf32>
    %17 = arith.cmpf ogt, %15, %16 : vector<64x128xf32>
    %cst_13 = arith.constant 0.00999999977 : f32
    %18 = vector.broadcast %cst_13 : f32 to vector<64x128xf32>
    %19 = arith.mulf %18, %15 : vector<64x128xf32>
    %20 = arith.select %17, %15, %19 : vector<64x128xi1>, vector<64x128xf32>
    %c0_14 = arith.constant 0 : index
    %c0_15 = arith.constant 0 : index
    %21 = vector.load %arg6[%c0_14, %c0_15] : memref<32x64xf32, #tpu.memory_space<vmem>>, vector<32x64xf32>
    %cst_16 = arith.constant dense<0.000000e+00> : vector<32x128xf32>
    %22 = tpu.matmul %21, %20, %cst_16 {dimension_numbers = #tpu.dot_dimension_numbers<[1], [0], [0], [1], [0, 0, 1, 1], [], []>} : vector<32x64xf32>, vector<64x128xf32>, vector<32x128xf32> -> vector<32x128xf32>
    %c0_17 = arith.constant 0 : index
    %c0_18 = arith.constant 0 : index
    %23 = vector.load %arg7[%c0_17, %c0_18] : memref<32x1xf32, #tpu.memory_space<vmem>>, vector<32x1xf32>
    %24 = vector.broadcast %23 : vector<32x1xf32> to vector<32x128xf32>
    %25 = arith.addf %22, %24 : vector<32x128xf32>
    %cst_19 = arith.constant 0.000000e+00 : f32
    %26 = vector.broadcast %cst_19 : f32 to vector<32x128xf32>
    %27 = arith.cmpf ogt, %25, %26 : vector<32x128xf32>
    %cst_20 = arith.constant 0.00999999977 : f32
    %28 = vector.broadcast %cst_20 : f32 to vector<32x128xf32>
    %29 = arith.mulf %28, %25 : vector<32x128xf32>
    %30 = arith.select %27, %25, %29 : vector<32x128xi1>, vector<32x128xf32>
    %c0_21 = arith.constant 0 : index
    %c0_22 = arith.constant 0 : index
    %31 = vector.load %arg8[%c0_21, %c0_22] : memref<32x1xf32, #tpu.memory_space<vmem>>, vector<32x1xf32>
    %32 = vector.broadcast %31 : vector<32x1xf32> to vector<32x128xf32>
    %33 = arith.mulf %30, %32 : vector<32x128xf32>
    %cst_23 = arith.constant dense<0.000000e+00> : vector<128xf32>
    %34 = vector.multi_reduction <add>, %33, %cst_23 [0] : vector<32x128xf32> to vector<128xf32>
    %35 = vector.shape_cast %34 : vector<128xf32> to vector<1x128xf32>
    %c0_24 = arith.constant 0 : index
    %c0_25 = arith.constant 0 : index
    %36 = vector.load %arg9[%c0_24, %c0_25] : memref<1x1xf32, #tpu.memory_space<vmem>>, vector<1x1xf32>
    %37 = vector.broadcast %36 : vector<1x1xf32> to vector<1x128xf32>
    %38 = arith.addf %35, %37 : vector<1x128xf32>
    %c0_26 = arith.constant 0 : index
    %c0_27 = arith.constant 0 : index
    %39 = vector.load %arg10[%c0_26, %c0_27] : memref<1x128xf32, #tpu.memory_space<vmem>>, vector<1x128xf32>
    tpu.vector_store %arg10[%c0_26, %c0_27], %38 {strides = array<i32>} : memref<1x128xf32, #tpu.memory_space<vmem>>, vector<1x128xf32>,
    return
  }
  func.func @transform_0(%arg0: i32) -> (i32, i32) {
    %c0_i32 = arith.constant 0 : i32
    %c0_i32_0 = arith.constant 0 : i32
    return %arg0, %c0_i32 : i32, i32
  }
  func.func @transform_1(%arg0: i32) -> (i32, i32) {
    %c0_i32 = arith.constant 0 : i32
    %c0_i32_0 = arith.constant 0 : i32
    %c0_i32_1 = arith.constant 0 : i32
    return %c0_i32, %c0_i32_0 : i32, i32
  }
  func.func @transform_2(%arg0: i32) -> (i32, i32) {
    %c0_i32 = arith.constant 0 : i32
    %c0_i32_0 = arith.constant 0 : i32
    %c0_i32_1 = arith.constant 0 : i32
    return %c0_i32, %c0_i32_0 : i32, i32
  }
  func.func @transform_3(%arg0: i32) -> (i32, i32) {
    %c0_i32 = arith.constant 0 : i32
    %c0_i32_0 = arith.constant 0 : i32
    %c0_i32_1 = arith.constant 0 : i32
    return %c0_i32, %c0_i32_0 : i32, i32
  }
  func.func @transform_4(%arg0: i32) -> (i32, i32) {
    %c0_i32 = arith.constant 0 : i32
    %c0_i32_0 = arith.constant 0 : i32
    %c0_i32_1 = arith.constant 0 : i32
    return %c0_i32, %c0_i32_0 : i32, i32
  }
  func.func @transform_5(%arg0: i32) -> (i32, i32) {
    %c0_i32 = arith.constant 0 : i32
    %c0_i32_0 = arith.constant 0 : i32
    %c0_i32_1 = arith.constant 0 : i32
    return %c0_i32, %c0_i32_0 : i32, i32
  }
  func.func @transform_6(%arg0: i32) -> (i32, i32) {
    %c0_i32 = arith.constant 0 : i32
    %c0_i32_0 = arith.constant 0 : i32
    %c0_i32_1 = arith.constant 0 : i32
    return %c0_i32, %c0_i32_0 : i32, i32
  }
  func.func @transform_7(%arg0: i32) -> (i32, i32) {
    %c0_i32 = arith.constant 0 : i32
    %c0_i32_0 = arith.constant 0 : i32
    %c0_i32_1 = arith.constant 0 : i32
    return %c0_i32, %c0_i32_0 : i32, i32
  }
  func.func @transform_8(%arg0: i32) -> (i32, i32) {
    %c0_i32 = arith.constant 0 : i32
    %c0_i32_0 = arith.constant 0 : i32
    %c0_i32_1 = arith.constant 0 : i32
    return %c0_i32, %c0_i32_0 : i32, i32
  }
  func.func @transform_9(%arg0: i32) -> (i32, i32) {
    %c0_i32 = arith.constant 0 : i32
    %c0_i32_0 = arith.constant 0 : i32
    return %c0_i32, %arg0 : i32, i32
  }
}

</mosaic_0001>

<llo_original>
// kernel: tpu_custom_call.1
$region0: #{tpu_custom_call.1}
  #allocation0 [shape = 'u32[]', space=smem, size = 0x4, offset = 0x4, fixed_abs, tag = 'smem constant byte address 0x4 - core index']
  #allocation1 [shape = 'u32[72,128]{1,0:T(1,128)}', space=vmem, size = 0x9000, scoped, tag = 'internal scratch']
  #allocation2 [shape = 'f32[1,1]{1,0:T(1,128)S(1)}', space=vmem, size = 0x200, scoped, tag = 'scoped memory for tpu_custom_call.1']
  %s0 = inlined_call_operand.vmem [shape: f32[128,32], index: 0, kind: input, shape index: {}]
  %s1 = inlined_call_operand.vmem [shape: f32[64,32], index: 1, kind: input, shape index: {}]
  %s2 = inlined_call_operand.vmem [shape: f32[64,1], index: 2, kind: input, shape index: {}]
  %s3 = inlined_call_operand.vmem [shape: f32[64,64], index: 3, kind: input, shape index: {}]
  %s4 = inlined_call_operand.vmem [shape: f32[64,1], index: 4, kind: input, shape index: {}]
  %s5 = inlined_call_operand.vmem [shape: f32[32,64], index: 5, kind: input, shape index: {}]
  %s6 = inlined_call_operand.vmem [shape: f32[32,1], index: 6, kind: input, shape index: {}]
  %s7 = inlined_call_operand.vmem [shape: f32[32,1], index: 7, kind: input, shape index: {}]
  %s8 = inlined_call_operand.<no memory space> [shape: f32[1,1], index: 8, kind: input, shape index: {}]
  %s9 = inlined_call_operand.hbm [shape: f32[1,128], index: 9, kind: output, shape index: {}]
  %s10 = sld [smem:[#allocation0]]
  $region46: #{tpu_custom_call.1} parent=0
    _
  %s12 = ssub.s32 1, %s10
  %s13 = scalar_select 0, %s12, %s10
  %v14 = vstv %s8
  %15 = vst [vmem:[#allocation2] sm:$0x1] %v14
  $region1: #{tpu_custom_call.1} parent=0
    #allocation3 [shape = 'u8[512]{0}', space=vmem, size = 0x400, scoped, tag = 'output window, operand 0, single buffered']
    #allocation4 [shape = 's32[1]{0}', space=sflag, size = 0x4, scoped, tag = 'scoped memory for tpu_custom_call.1']
    %16 = vsyncpa [#allocation4], 0
    // Predicated region
    $region2: #{tpu_custom_call.1} parent=1 // pred_check
      _
    $region3: #{tpu_custom_call.1} parent=1 // pred_check_branch
      %18 = sbr.rel (0) target = $region5
    $region4: #{tpu_custom_call.1} parent=1 // pred_region
      _
    $region5: #{tpu_custom_call.1} parent=1 // pred_fallthru
      _
    // Predicated region
    $region6: #{tpu_custom_call.1} parent=1 // pred_check
      _
    $region7: #{tpu_custom_call.1} parent=1 // pred_check_branch
      %20 = sbr.rel (0) target = $region9
    $region8: #{tpu_custom_call.1} parent=1 // pred_region
      _
    $region9: #{tpu_custom_call.1} parent=1 // pred_fallthru
      _
    // Predicated region
    $region10: #{tpu_custom_call.1} parent=1 // pred_check
      _
    $region11: #{tpu_custom_call.1} parent=1 // pred_check_branch
      %22 = sbr.rel (0) target = $region13
    $region12: #{tpu_custom_call.1} parent=1 // pred_region
      _
    $region13: #{tpu_custom_call.1} parent=1 // pred_fallthru
      _
    // Predicated region
    $region14: #{tpu_custom_call.1} parent=1 // pred_check
      _
    $region15: #{tpu_custom_call.1} parent=1 // pred_check_branch
      %24 = sbr.rel (0) target = $region17
    $region16: #{tpu_custom_call.1} parent=1 // pred_region
      _
    $region17: #{tpu_custom_call.1} parent=1 // pred_fallthru
      _
    // Predicated region
    $region18: #{tpu_custom_call.1} parent=1 // pred_check
      _
    $region19: #{tpu_custom_call.1} parent=1 // pred_check_branch
      %26 = sbr.rel (0) target = $region21
    $region20: #{tpu_custom_call.1} parent=1 // pred_region
      _
    $region21: #{tpu_custom_call.1} parent=1 // pred_fallthru
      _
    // Predicated region
    $region22: #{tpu_custom_call.1} parent=1 // pred_check
      _
    $region23: #{tpu_custom_call.1} parent=1 // pred_check_branch
      %28 = sbr.rel (0) target = $region25
    $region24: #{tpu_custom_call.1} parent=1 // pred_region
      _
    $region25: #{tpu_custom_call.1} parent=1 // pred_fallthru
      _
    // Predicated region
    $region26: #{tpu_custom_call.1} parent=1 // pred_check
      _
    $region27: #{tpu_custom_call.1} parent=1 // pred_check_branch
      %30 = sbr.rel (0) target = $region29
    $region28: #{tpu_custom_call.1} parent=1 // pred_region
      _
    $region29: #{tpu_custom_call.1} parent=1 // pred_fallthru
      _
    // Predicated region
    $region30: #{tpu_custom_call.1} parent=1 // pred_check
      _
    $region31: #{tpu_custom_call.1} parent=1 // pred_check_branch
      %32 = sbr.rel (0) target = $region33
    $region32: #{tpu_custom_call.1} parent=1 // pred_region
      _
    $region33: #{tpu_custom_call.1} parent=1 // pred_fallthru
      _
    // Predicated region
    $region34: #{tpu_custom_call.1} parent=1 // pred_check
      _
    $region35: #{tpu_custom_call.1} parent=1 // pred_check_branch
      %34 = sbr.rel (0) target = $region37
    $region36: #{tpu_custom_call.1} parent=1 // pred_region
      _
    $region37: #{tpu_custom_call.1} parent=1 // pred_fallthru
      _
    %v35 = vld [vmem:[%s1] sm:$0xff]
    %v36 = vld [vmem:[%s1 + $0x8] sm:$0xff]
    %v37 = vld [vmem:[%s1 + $0x10] sm:$0xff]
    %v38 = vld [vmem:[%s1 + $0x18] sm:$0xff]
    %v39 = vld [vmem:[%s1 + $0x20] sm:$0xff]
    %v40 = vld [vmem:[%s1 + $0x28] sm:$0xff]
    %v41 = vld [vmem:[%s1 + $0x30] sm:$0xff]
    %v42 = vld [vmem:[%s1 + $0x38] sm:$0xff]
    %v43 = vld [vmem:[%s0] sm:$0xff]
    %v44 = vld [vmem:[%s0 + $0x8] sm:$0xff]
    %v45 = vld [vmem:[%s0 + $0x10] sm:$0xff]
    %v46 = vld [vmem:[%s0 + $0x18] sm:$0xff]
    %v47 = vld [vmem:[%s0 + $0x20] sm:$0xff]
    %v48 = vld [vmem:[%s0 + $0x28] sm:$0xff]
    %v49 = vld [vmem:[%s0 + $0x30] sm:$0xff]
    %v50 = vld [vmem:[%s0 + $0x38] sm:$0xff]
    %v51 = vld [vmem:[%s0 + $0x40] sm:$0xff]
    %v52 = vld [vmem:[%s0 + $0x48] sm:$0xff]
    %v53 = vld [vmem:[%s0 + $0x50] sm:$0xff]
    %v54 = vld [vmem:[%s0 + $0x58] sm:$0xff]
    %v55 = vld [vmem:[%s0 + $0x60] sm:$0xff]
    %v56 = vld [vmem:[%s0 + $0x68] sm:$0xff]
    %v57 = vld [vmem:[%s0 + $0x70] sm:$0xff]
    %v58 = vld [vmem:[%s0 + $0x78] sm:$0xff]
    %v59 = vld [vmem:[%s2] sm:$0xff]
    %v60 = vld [vmem:[%s2 + $0x8] sm:$0xff]
    %v61 = vld [vmem:[%s2 + $0x10] sm:$0xff]
    %v62 = vld [vmem:[%s2 + $0x18] sm:$0xff]
    %v63 = vld [vmem:[%s2 + $0x20] sm:$0xff]
    %v64 = vld [vmem:[%s2 + $0x28] sm:$0xff]
    %v65 = vld [vmem:[%s2 + $0x30] sm:$0xff]
    %v66 = vld [vmem:[%s2 + $0x38] sm:$0xff]
    %68 = vset.pattern.permute.xlu0 0
    %69 = vperm.xlu0 %68, %v59
    %v70 = vpop.permute.xlu0 %69
    %73 = vset.pattern.permute.xlu0 0
    %74 = vperm.xlu0 %73, %v60
    %v75 = vpop.permute.xlu0 %74
    %78 = vset.pattern.permute.xlu0 0
    %79 = vperm.xlu0 %78, %v61
    %v80 = vpop.permute.xlu0 %79
    %83 = vset.pattern.permute.xlu0 0
    %84 = vperm.xlu0 %83, %v62
    %v85 = vpop.permute.xlu0 %84
    %88 = vset.pattern.permute.xlu0 0
    %89 = vperm.xlu0 %88, %v63
    %v90 = vpop.permute.xlu0 %89
    %93 = vset.pattern.permute.xlu0 0
    %94 = vperm.xlu0 %93, %v64
    %v95 = vpop.permute.xlu0 %94
    %98 = vset.pattern.permute.xlu0 0
    %99 = vperm.xlu0 %98, %v65
    %v100 = vpop.permute.xlu0 %99
    %103 = vset.pattern.permute.xlu0 0
    %104 = vperm.xlu0 %103, %v66
    %v105 = vpop.permute.xlu0 %104
    %vm107 = vcmask 261120
    %v109 = vsel %vm107, %v35, 0
    %v112 = vsel %vm107, %v36, 0
    %v115 = vsel %vm107, %v37, 0
    %v118 = vsel %vm107, %v38, 0
    %v121 = vsel %vm107, %v39, 0
    %v124 = vsel %vm107, %v40, 0
    %v127 = vsel %vm107, %v41, 0
    %v130 = vsel %vm107, %v42, 0
    %v133 = vsel %vm107, %v43, 0
    %v136 = vsel %vm107, %v44, 0
    %v139 = vsel %vm107, %v45, 0
    %v142 = vsel %vm107, %v46, 0
    %v145 = vsel %vm107, %v47, 0
    %v148 = vsel %vm107, %v48, 0
    %v151 = vsel %vm107, %v49, 0
    %v154 = vsel %vm107, %v50, 0
    %v157 = vsel %vm107, %v51, 0
    %v160 = vsel %vm107, %v52, 0
    %v163 = vsel %vm107, %v53, 0
    %v166 = vsel %vm107, %v54, 0
    %v169 = vsel %vm107, %v55, 0
    %v172 = vsel %vm107, %v56, 0
    %v175 = vsel %vm107, %v57, 0
    %v178 = vsel %vm107, %v58, 0
    %180 = vmatpush.xpose.msra.mxu0 %v178
    %181 = vmatpush.xpose.msra.mxu0 %v175
    %182 = vmatpush.xpose.msra.mxu0 %v172
    %183 = vmatpush.xpose.msra.mxu0 %v169
    %184 = vmatpush.xpose.msra.mxu0 %v166
    %185 = vmatpush.xpose.msra.mxu0 %v163
    %186 = vmatpush.xpose.msra.mxu0 %v160
    %187 = vmatpush.xpose.msra.mxu0 %v157
    %188 = vmatpush.xpose.msra.mxu0 %v154
    %189 = vmatpush.xpose.msra.mxu0 %v151
    %190 = vmatpush.xpose.msra.mxu0 %v148
    %191 = vmatpush.xpose.msra.mxu0 %v145
    %192 = vmatpush.xpose.msra.mxu0 %v142
    %193 = vmatpush.xpose.msra.mxu0 %v139
    %194 = vmatpush.xpose.msra.mxu0 %v136
    %195 = vmatpush.xpose.msra.mxu0 %v133
    %196 = vmatmul.f32.gmra.mxu0 %v109
    %v197 = vpop.f32.mrf.mxu0
    %v198 = vadd.f32 %v70, %v197
    %199 = vmatmul.f32.gmra.mxu0 %v112
    %v200 = vpop.f32.mrf.mxu0
    %v201 = vadd.f32 %v75, %v200
    %202 = vmatmul.f32.gmra.mxu0 %v115
    %v203 = vpop.f32.mrf.mxu0
    %v204 = vadd.f32 %v80, %v203
    %205 = vmatmul.f32.gmra.mxu0 %v118
    %v206 = vpop.f32.mrf.mxu0
    %v207 = vadd.f32 %v85, %v206
    %208 = vmatmul.f32.gmra.mxu0 %v121
    %v209 = vpop.f32.mrf.mxu0
    %v210 = vadd.f32 %v90, %v209
    %211 = vmatmul.f32.gmra.mxu0 %v124
    %v212 = vpop.f32.mrf.mxu0
    %v213 = vadd.f32 %v95, %v212
    %214 = vmatmul.f32.gmra.mxu0 %v127
    %v215 = vpop.f32.mrf.mxu0
    %v216 = vadd.f32 %v100, %v215
    %217 = vmatmul.f32.gmra.mxu0 %v130
    %v218 = vpop.f32.mrf.mxu0
    %v219 = vadd.f32 %v105, %v218
    %220 = vdwg.mxu0
    %vm221 = vcmp.gt.f32.partialorder %v198, 0.0
    %vm222 = vcmp.gt.f32.partialorder %v201, 0.0
    %vm223 = vcmp.gt.f32.partialorder %v204, 0.0
    %vm224 = vcmp.gt.f32.partialorder %v207, 0.0
    %vm225 = vcmp.gt.f32.partialorder %v210, 0.0
    %vm226 = vcmp.gt.f32.partialorder %v213, 0.0
    %vm227 = vcmp.gt.f32.partialorder %v216, 0.0
    %vm228 = vcmp.gt.f32.partialorder %v219, 0.0
    %v229 = vmul.f32 %v198, 0.01
    %v230 = vmul.f32 %v201, 0.01
    %v231 = vmul.f32 %v204, 0.01
    %v232 = vmul.f32 %v207, 0.01
    %v233 = vmul.f32 %v210, 0.01
    %v234 = vmul.f32 %v213, 0.01
    %v235 = vmul.f32 %v216, 0.01
    %v236 = vmul.f32 %v219, 0.01
    %v237 = vsel %vm221, %v198, %v229
    %v238 = vsel %vm222, %v201, %v230
    %v239 = vsel %vm223, %v204, %v231
    %v240 = vsel %vm224, %v207, %v232
    %v241 = vsel %vm225, %v210, %v233
    %v242 = vsel %vm226, %v213, %v234
    %v243 = vsel %vm227, %v216, %v235
    %v244 = vsel %vm228, %v219, %v236
    %v245 = vld [vmem:[%s3] sm:$0xff]
    %v246 = vld [vmem:[%s3 + $0x8] sm:$0xff]
    %v247 = vld [vmem:[%s3 + $0x10] sm:$0xff]
    %v248 = vld [vmem:[%s3 + $0x18] sm:$0xff]
    %v249 = vld [vmem:[%s3 + $0x20] sm:$0xff]
    %v250 = vld [vmem:[%s3 + $0x28] sm:$0xff]
    %v251 = vld [vmem:[%s3 + $0x30] sm:$0xff]
    %v252 = vld [vmem:[%s3 + $0x38] sm:$0xff]
    %v253 = vld [vmem:[%s4] sm:$0xff]
    %v254 = vld [vmem:[%s4 + $0x8] sm:$0xff]
    %v255 = vld [vmem:[%s4 + $0x10] sm:$0xff]
    %v256 = vld [vmem:[%s4 + $0x18] sm:$0xff]
    %v257 = vld [vmem:[%s4 + $0x20] sm:$0xff]
    %v258 = vld [vmem:[%s4 + $0x28] sm:$0xff]
    %v259 = vld [vmem:[%s4 + $0x30] sm:$0xff]
    %v260 = vld [vmem:[%s4 + $0x38] sm:$0xff]
    %262 = vset.pattern.permute.xlu0 0
    %263 = vperm.xlu0 %262, %v253
    %v264 = vpop.permute.xlu0 %263
    %267 = vset.pattern.permute.xlu0 0
    %268 = vperm.xlu0 %267, %v254
    %v269 = vpop.permute.xlu0 %268
    %272 = vset.pattern.permute.xlu0 0
    %273 = vperm.xlu0 %272, %v255
    %v274 = vpop.permute.xlu0 %273
    %277 = vset.pattern.permute.xlu0 0
    %278 = vperm.xlu0 %277, %v256
    %v279 = vpop.permute.xlu0 %278
    %282 = vset.pattern.permute.xlu0 0
    %283 = vperm.xlu0 %282, %v257
    %v284 = vpop.permute.xlu0 %283
    %287 = vset.pattern.permute.xlu0 0
    %288 = vperm.xlu0 %287, %v258
    %v289 = vpop.permute.xlu0 %288
    %292 = vset.pattern.permute.xlu0 0
    %293 = vperm.xlu0 %292, %v259
    %v294 = vpop.permute.xlu0 %293
    %297 = vset.pattern.permute.xlu0 0
    %298 = vperm.xlu0 %297, %v260
    %v299 = vpop.permute.xlu0 %298
    %vm301 = vcmask 523264
    %v303 = vsel %vm301, %v245, 0
    %v306 = vsel %vm301, %v246, 0
    %v309 = vsel %vm301, %v247, 0
    %v312 = vsel %vm301, %v248, 0
    %v315 = vsel %vm301, %v249, 0
    %v318 = vsel %vm301, %v250, 0
    %v321 = vsel %vm301, %v251, 0
    %v324 = vsel %vm301, %v252, 0
    %326 = vmatpush.msra.mxu0 0.0
    %327 = vmatpush.msra.mxu0 0.0
    %328 = vmatpush.msra.mxu0 0.0
    %329 = vmatpush.msra.mxu0 0.0
    %330 = vmatpush.msra.mxu0 0.0
    %331 = vmatpush.msra.mxu0 0.0
    %332 = vmatpush.msra.mxu0 0.0
    %333 = vmatpush.msra.mxu0 0.0
    %334 = vmatpush.msra.mxu0 %v244
    %335 = vmatpush.msra.mxu0 %v243
    %336 = vmatpush.msra.mxu0 %v242
    %337 = vmatpush.msra.mxu0 %v241
    %338 = vmatpush.msra.mxu0 %v240
    %339 = vmatpush.msra.mxu0 %v239
    %340 = vmatpush.msra.mxu0 %v238
    %341 = vmatpush.msra.mxu0 %v237
    %342 = vmatmul.f32.gmra.mxu0 %v303
    %v343 = vpop.f32.mrf.mxu0
    %v344 = vadd.f32 %v264, %v343
    %345 = vmatmul.f32.gmra.mxu0 %v306
    %v346 = vpop.f32.mrf.mxu0
    %v347 = vadd.f32 %v269, %v346
    %348 = vmatmul.f32.gmra.mxu0 %v309
    %v349 = vpop.f32.mrf.mxu0
    %v350 = vadd.f32 %v274, %v349
    %351 = vmatmul.f32.gmra.mxu0 %v312
    %v352 = vpop.f32.mrf.mxu0
    %v353 = vadd.f32 %v279, %v352
    %354 = vmatmul.f32.gmra.mxu0 %v315
    %v355 = vpop.f32.mrf.mxu0
    %v356 = vadd.f32 %v284, %v355
    %357 = vmatmul.f32.gmra.mxu0 %v318
    %v358 = vpop.f32.mrf.mxu0
    %v359 = vadd.f32 %v289, %v358
    %360 = vmatmul.f32.gmra.mxu0 %v321
    %v361 = vpop.f32.mrf.mxu0
    %v362 = vadd.f32 %v294, %v361
    %363 = vmatmul.f32.gmra.mxu0 %v324
    %v364 = vpop.f32.mrf.mxu0
    %v365 = vadd.f32 %v299, %v364
    %366 = vdwg.mxu0
    %vm367 = vcmp.gt.f32.partialorder %v344, 0.0
    %vm368 = vcmp.gt.f32.partialorder %v347, 0.0
    %vm369 = vcmp.gt.f32.partialorder %v350, 0.0
    %vm370 = vcmp.gt.f32.partialorder %v353, 0.0
    %vm371 = vcmp.gt.f32.partialorder %v356, 0.0
    %vm372 = vcmp.gt.f32.partialorder %v359, 0.0
    %vm373 = vcmp.gt.f32.partialorder %v362, 0.0
    %vm374 = vcmp.gt.f32.partialorder %v365, 0.0
    %v375 = vmul.f32 %v344, 0.01
    %v376 = vmul.f32 %v347, 0.01
    %v377 = vmul.f32 %v350, 0.01
    %v378 = vmul.f32 %v353, 0.01
    %v379 = vmul.f32 %v356, 0.01
    %v380 = vmul.f32 %v359, 0.01
    %v381 = vmul.f32 %v362, 0.01
    %v382 = vmul.f32 %v365, 0.01
    %v383 = vsel %vm367, %v344, %v375
    %v384 = vsel %vm368, %v347, %v376
    %v385 = vsel %vm369, %v350, %v377
    %v386 = vsel %vm370, %v353, %v378
    %v387 = vsel %vm371, %v356, %v379
    %v388 = vsel %vm372, %v359, %v380
    %v389 = vsel %vm373, %v362, %v381
    %v390 = vsel %vm374, %v365, %v382
    %v391 = vld [vmem:[%s5] sm:$0xff]
    %v392 = vld [vmem:[%s5 + $0x8] sm:$0xff]
    %v393 = vld [vmem:[%s5 + $0x10] sm:$0xff]
    %v394 = vld [vmem:[%s5 + $0x18] sm:$0xff]
    %v395 = vld [vmem:[%s6] sm:$0xff]
    %v396 = vld [vmem:[%s6 + $0x8] sm:$0xff]
    %v397 = vld [vmem:[%s6 + $0x10] sm:$0xff]
    %v398 = vld [vmem:[%s6 + $0x18] sm:$0xff]
    %400 = vset.pattern.permute.xlu0 0
    %401 = vperm.xlu0 %400, %v395
    %v402 = vpop.permute.xlu0 %401
    %405 = vset.pattern.permute.xlu0 0
    %406 = vperm.xlu0 %405, %v396
    %v407 = vpop.permute.xlu0 %406
    %410 = vset.pattern.permute.xlu0 0
    %411 = vperm.xlu0 %410, %v397
    %v412 = vpop.permute.xlu0 %411
    %415 = vset.pattern.permute.xlu0 0
    %416 = vperm.xlu0 %415, %v398
    %v417 = vpop.permute.xlu0 %416
    %v420 = vsel %vm301, %v391, 0
    %v423 = vsel %vm301, %v392, 0
    %v426 = vsel %vm301, %v393, 0
    %v429 = vsel %vm301, %v394, 0
    %431 = vmatpush.msra.mxu0 0.0
    %432 = vmatpush.msra.mxu0 0.0
    %433 = vmatpush.msra.mxu0 0.0
    %434 = vmatpush.msra.mxu0 0.0
    %435 = vmatpush.msra.mxu0 0.0
    %436 = vmatpush.msra.mxu0 0.0
    %437 = vmatpush.msra.mxu0 0.0
    %438 = vmatpush.msra.mxu0 0.0
    %439 = vmatpush.msra.mxu0 %v390
    %440 = vmatpush.msra.mxu0 %v389
    %441 = vmatpush.msra.mxu0 %v388
    %442 = vmatpush.msra.mxu0 %v387
    %443 = vmatpush.msra.mxu0 %v386
    %444 = vmatpush.msra.mxu0 %v385
    %445 = vmatpush.msra.mxu0 %v384
    %446 = vmatpush.msra.mxu0 %v383
    %447 = vmatmul.f32.gmra.mxu0 %v420
    %v448 = vpop.f32.mrf.mxu0
    %v449 = vadd.f32 %v402, %v448
    %450 = vmatmul.f32.gmra.mxu0 %v423
    %v451 = vpop.f32.mrf.mxu0
    %v452 = vadd.f32 %v407, %v451
    %453 = vmatmul.f32.gmra.mxu0 %v426
    %v454 = vpop.f32.mrf.mxu0
    %v455 = vadd.f32 %v412, %v454
    %456 = vmatmul.f32.gmra.mxu0 %v429
    %v457 = vpop.f32.mrf.mxu0
    %v458 = vadd.f32 %v417, %v457
    %459 = vdwg.mxu0
    %vm460 = vcmp.gt.f32.partialorder %v449, 0.0
    %vm461 = vcmp.gt.f32.partialorder %v452, 0.0
    %vm462 = vcmp.gt.f32.partialorder %v455, 0.0
    %vm463 = vcmp.gt.f32.partialorder %v458, 0.0
    %v464 = vmul.f32 %v449, 0.01
    %v465 = vmul.f32 %v452, 0.01
    %v466 = vmul.f32 %v455, 0.01
    %v467 = vmul.f32 %v458, 0.01
    %v468 = vsel %vm460, %v449, %v464
    %v469 = vsel %vm461, %v452, %v465
    %v470 = vsel %vm462, %v455, %v466
    %v471 = vsel %vm463, %v458, %v467
    %v472 = vld [vmem:[%s7] sm:$0xff]
    %v473 = vld [vmem:[%s7 + $0x8] sm:$0xff]
    %v474 = vld [vmem:[%s7 + $0x10] sm:$0xff]
    %v475 = vld [vmem:[%s7 + $0x18] sm:$0xff]
    %477 = vset.pattern.permute.xlu0 0
    %478 = vperm.xlu0 %477, %v472
    %v479 = vpop.permute.xlu0 %478
    %482 = vset.pattern.permute.xlu0 0
    %483 = vperm.xlu0 %482, %v473
    %v484 = vpop.permute.xlu0 %483
    %487 = vset.pattern.permute.xlu0 0
    %488 = vperm.xlu0 %487, %v474
    %v489 = vpop.permute.xlu0 %488
    %492 = vset.pattern.permute.xlu0 0
    %493 = vperm.xlu0 %492, %v475
    %v494 = vpop.permute.xlu0 %493
    %v496 = vmul.f32 %v468, %v479
    %v497 = vmul.f32 %v469, %v484
    %v498 = vmul.f32 %v470, %v489
    %v499 = vmul.f32 %v471, %v494
    %v500 = vadd.f32 %v496, %v497
    %v501 = vadd.f32 %v500, %v498
    %v502 = vadd.f32 %v501, %v499
    %v503 = vrot.slane %v502, 4
    %v504 = vadd.f32 %v502, %v503
    %v505 = vrot.slane %v504, 2
    %v506 = vadd.f32 %v504, %v505
    %v507 = vrot.slane %v506, 1
    %v508 = vadd.f32 %v506, %v507
    %v509 = vld [vmem:[#allocation2] sm:$0x1]
    %511 = vset.pattern.permute.xlu0 0
    %512 = vperm.xlu0 %511, %v509
    %v513 = vpop.permute.xlu0 %512
    %v515 = vperm.slane %v513, 0
    %v516 = vadd.f32 %v508, %v515
    %517 = vst [vmem:[#allocation3] sm:$0x1] %v516
    // Predicated region
    $region38: #{tpu_custom_call.1} parent=1 // pred_check
      _
    $region39: #{tpu_custom_call.1} parent=1 // pred_check_branch
      %519 = sbr.rel (0) target = $region41
    $region40: #{tpu_custom_call.1} parent=1 // pred_region
      %521 = vsyncadd [#allocation4], 0
      %s523 = sshll.u32 [#allocation3], 4
      %s524 = int_to_ptr.vmem [resolvable:$true] %s523
      %s525 = sshll.u32 %s9, 4
      %s526 = int_to_ptr.hbm [resolvable:$true] %s525
      %528 = dma.vmem_to_hbm [thread:$0]  %s524, 16, %s526, [#allocation4]
    $region41: #{tpu_custom_call.1} parent=1 // pred_fallthru
      _
    // Predicated region
    $region42: #{tpu_custom_call.1} parent=1 // pred_check
      _
    $region43: #{tpu_custom_call.1} parent=1 // pred_check_branch
      %530 = sbr.rel (0) target = $region45
    $region44: #{tpu_custom_call.1} parent=1 // pred_region
      %532 = dma.done [#allocation4], 16
    $region45: #{tpu_custom_call.1} parent=1 // pred_fallthru
      _
    %533 = vsyncpa [#allocation4], 1

</llo_original>
